<compile_context>
chip_gen: v7x
topology: tpu7x:2x2x1
jax: 0.10.0
libtpu: 0.0.40
codegen_flags: <defaults>
</compile_context>

<pallas_src>
import math
import jax
import jax.numpy as jnp
from jax.experimental import pallas as pl
from jax.experimental.pallas import tpu as pltpu


def _lrelu(x, slope=0.2):
    return jnp.where(x > 0, x, slope * x)


def relation_kernel(ft_ref, nb_ref, w1_ref, w2_ref, s2_ref, r_ref, out_ref):
    """Packed layout: one row holds two original nodes -> 2F lanes (128 at F=64).

    p   = ft_pk @ W1_bd + nb_pk @ W2_bd            (tn, 4F) f32
        = [gamma_pre_a | gamma_pre_b | beta_pre_a | beta_pre_b]
    rv  = lrelu(p) @ S2                            (tn, 2F) f32
        = [lrelu(pg_a)*r + lrelu(pb_a) | lrelu(pg_b)*r + lrelu(pb_b)]
    out = ft - nb + r + rv   (the '+1' of gamma folded into the '+ r' term)
    """
    ft = ft_ref[...]                                               # (tn, 2F)
    nb = nb_ref[...]                                               # (tn, 2F)
    p = (jnp.dot(ft, w1_ref[...], preferred_element_type=jnp.float32)
         + jnp.dot(nb, w2_ref[...], preferred_element_type=jnp.float32))
    rv = jnp.dot(_lrelu(p), s2_ref[...], preferred_element_type=jnp.float32)
    out = ft.astype(jnp.float32) - nb.astype(jnp.float32) + r_ref[...] + rv
    out_ref[...] = out.astype(out_ref.dtype)


def _num_tensorcores():
    """2 TensorCores per chip on v7x; 1 on v5e/v6e. Defensive: default 1."""
    try:
        kind = jax.devices()[0].device_kind.lower()
        if "v7" in kind or "7x" in kind:
            return 2
    except Exception:
        pass
    return 1


def _choose_row_tile(n_rows, row_tile, num_cores, align):
    """Balanced tiles: waste is < `align` rows per step (never ~2x padding).

    On multi-TC chips the step count is rounded up to a multiple of num_cores
    so both cores get work; on single-TC chips a fits-in-one-tile workload
    stays a single grid step (no pointless pipeline prologue/epilogue).
    """
    steps = max(1, pl.cdiv(n_rows, max(row_tile, align)))
    if num_cores > 1:
        steps = ((steps + num_cores - 1) // num_cores) * num_cores
        steps = min(steps, max(1, pl.cdiv(n_rows, align)))
    tn = pl.cdiv(n_rows, steps)
    tn = ((tn + align - 1) // align) * align
    steps = max(1, pl.cdiv(n_rows, tn))
    return tn, steps


def _pack_params(wg1, wg2, wb1, wb2, r, mxu_dtype):
    """Build block-diagonal packed weights / epilogue matrix / packed r row.

    W*_bd (2F, 4F):  [[W*g.T, 0, W*b.T, 0], [0, W*g.T, 0, W*b.T]]
    S2    (4F, 2F):  [[diag(r), 0], [0, diag(r)], [I, 0], [0, I]]
    r_pk  (1,  2F):  [r | r]
    """
    F = wg1.shape[0]
    f32 = jnp.float32
    z = jnp.zeros((F, F), f32)

    def bd(wg, wb):
        wg_t = wg.astype(f32).T
        wb_t = wb.astype(f32).T
        top = jnp.concatenate([wg_t, z, wb_t, z], axis=1)
        bot = jnp.concatenate([z, wg_t, z, wb_t], axis=1)
        return jnp.concatenate([top, bot], axis=0)                 # (2F, 4F)

    w1 = bd(wg1, wb1).astype(mxu_dtype)
    w2 = bd(wg2, wb2).astype(mxu_dtype)

    rvec = r.astype(f32).reshape(-1)                               # (F,)
    dr = jnp.diag(rvec)
    eye = jnp.eye(F, dtype=f32)
    s2 = jnp.concatenate([
        jnp.concatenate([dr, z], axis=1),
        jnp.concatenate([z, dr], axis=1),
        jnp.concatenate([eye, z], axis=1),
        jnp.concatenate([z, eye], axis=1)], axis=0)                # (4F, 2F)
    r_pk = jnp.concatenate([rvec, rvec]).reshape(1, 2 * F)         # (1, 2F)
    return w1, w2, s2, r_pk


def relation_forward(ft, neighbor, wg1, wg2, wb1, wb2, r, *, ablation=0,
                     row_tile=1024):
    """ft, neighbor: (N, F).  wg*/wb*: torch-Linear weights (F, F).  r: (1, F)."""
    N, F = ft.shape

    if ablation == 3:
        # Trivial elementwise path of the module; no matmuls -> plain JAX glue.
        return ft + r.astype(ft.dtype) - neighbor
    # TODO(synk): all ablation values other than 3 take the full gamma/beta path,
    # exactly like the reference module's forward().

    io_dtype = ft.dtype
    mxu_dtype = io_dtype if io_dtype == jnp.bfloat16 else jnp.float32
    w1, w2, s2, r_pk = _pack_params(wg1, wg2, wb1, wb2, r, mxu_dtype)

    # --- row tiling over the packed (N/2, 2F) view ---
    num_cores = _num_tensorcores()
    align = 16 if jnp.dtype(io_dtype).itemsize < 4 else 8
    n_pk = (N + 1) // 2
    tn, steps = _choose_row_tile(n_pk, row_tile, num_cores, align)

    rows_padded = 2 * steps * tn                 # original rows after padding
    n_pad = rows_padded - N
    if n_pad:
        ft_p = jnp.pad(ft, ((0, n_pad), (0, 0)))
        nb_p = jnp.pad(neighbor, ((0, n_pad), (0, 0)))
    else:
        ft_p, nb_p = ft, neighbor
    # Free contiguous reshape to the lane-dense packed layout.
    ft_pk = ft_p.reshape(steps * tn, 2 * F)
    nb_pk = nb_p.reshape(steps * tn, 2 * F)

    row_spec = pl.BlockSpec((tn, 2 * F), lambda i: (i, 0))
    w_spec = pl.BlockSpec((2 * F, 4 * F), lambda i: (0, 0))        # grid-invariant
    s2_spec = pl.BlockSpec((4 * F, 2 * F), lambda i: (0, 0))
    r_spec = pl.BlockSpec((1, 2 * F), lambda i: (0, 0))

    itemsize = jnp.dtype(io_dtype).itemsize
    npk_total = steps * tn
    cost = pl.CostEstimate(
        flops=48 * F * F * npk_total,            # 2 packed dots + S2 epilogue dot
        transcendentals=0,
        bytes_accessed=(3 * npk_total * 2 * F * itemsize
                        + (2 * (2 * F) * (4 * F) + (4 * F) * (2 * F) + 2 * F) * 4),
    )

    out_pk = pl.pallas_call(
        relation_kernel,
        out_shape=jax.ShapeDtypeStruct((npk_total, 2 * F), io_dtype),
        grid_spec=pltpu.PrefetchScalarGridSpec(
            num_scalar_prefetch=0,
            grid=(steps,),
            in_specs=[row_spec, row_spec, w_spec, w_spec, s2_spec, r_spec],
            out_specs=row_spec,
        ),
        compiler_params=pltpu.CompilerParams(dimension_semantics=("parallel",)),
        cost_estimate=cost,
    )(ft_pk, nb_pk, w1, w2, s2, r_pk)

    out = out_pk.reshape(rows_padded, F)
    return out[:N] if n_pad else out


def relation_reference(ft, neighbor, wg1, wg2, wb1, wb2, r):
    gamma = _lrelu(ft @ wg1.T + neighbor @ wg2.T) + 1.0
    beta = _lrelu(ft @ wb1.T + neighbor @ wb2.T)
    r_v = gamma * r + beta
    return ft + r_v - neighbor


if __name__ == "__main__":
    key = jax.random.PRNGKey(0)
    N, F = 256, 64   # small shapes: 256 nodes, 64 hidden features

    keys = jax.random.split(key, 7)
    # Deterministic synthetic parameters (torch Linear weight shape: (out, in) = (F, F)).
    w_stdv = 1.0 / math.sqrt(F)
    wg1 = jax.random.uniform(keys[0], (F, F), jnp.float32, -w_stdv, w_stdv)
    wg2 = jax.random.uniform(keys[1], (F, F), jnp.float32, -w_stdv, w_stdv)
    wb1 = jax.random.uniform(keys[2], (F, F), jnp.float32, -w_stdv, w_stdv)
    wb2 = jax.random.uniform(keys[3], (F, F), jnp.float32, -w_stdv, w_stdv)
    r = jax.random.uniform(keys[4], (1, F), jnp.float32, -w_stdv, w_stdv)

    ft = jax.random.normal(keys[5], (N, F), jnp.float32)
    neighbor = jax.random.normal(keys[6], (N, F), jnp.float32)

    # Main path.
    m = jax.block_until_ready(relation_forward(ft, neighbor, wg1, wg2, wb1, wb2, r))
    m_ref = relation_reference(ft, neighbor, wg1, wg2, wb1, wb2, r)
    assert m.shape == (N, F)
    assert jnp.allclose(m, m_ref, atol=1e-5, rtol=1e-5), "mismatch vs reference"

    # Odd row count exercises the pack/pad path.
    N2 = 131
    m2 = jax.block_until_ready(
        relation_forward(ft[:N2], neighbor[:N2], wg1, wg2, wb1, wb2, r))
    m2_ref = relation_reference(ft[:N2], neighbor[:N2], wg1, wg2, wb1, wb2, r)
    assert m2.shape == (N2, F)
    assert jnp.allclose(m2, m2_ref, atol=1e-5, rtol=1e-5), "odd-N mismatch vs reference"

    # Sanity-check the trivial ablation==3 path.
    m3 = relation_forward(ft, neighbor, wg1, wg2, wb1, wb2, r, ablation=3)
    assert jnp.allclose(m3, ft + r - neighbor, atol=1e-6), "ablation==3 mismatch"

    print("KERNEL_OK")
</pallas_src>

<mosaic_0001>
module attributes {stable_mosaic.version = 11 : i64} {
  func.func @relation_kernel(%arg0: i32, %arg1: memref<128x128xf32, #tpu.memory_space<vmem>>, %arg2: memref<128x128xf32, #tpu.memory_space<vmem>>, %arg3: memref<128x256xf32, #tpu.memory_space<vmem>>, %arg4: memref<128x256xf32, #tpu.memory_space<vmem>>, %arg5: memref<256x128xf32, #tpu.memory_space<vmem>>, %arg6: memref<1x128xf32, #tpu.memory_space<vmem>>, %arg7: memref<128x128xf32, #tpu.memory_space<vmem>>) attributes {dimension_semantics = [#tpu.dimension_semantics<parallel>], iteration_bounds = array<i64: 1>, scalar_prefetch = 0 : i64, scratch_operands = 0 : i64, tpu.core_type = #tpu.core_type<tc>, window_params = [{transform_indices = @transform_0, window_bounds = array<i64: 128, 128>}, {transform_indices = @transform_1, window_bounds = array<i64: 128, 128>}, {pipeline_mode = #tpu.pipeline_mode<synchronous>, transform_indices = @transform_2, window_bounds = array<i64: 128, 256>}, {pipeline_mode = #tpu.pipeline_mode<synchronous>, transform_indices = @transform_3, window_bounds = array<i64: 128, 256>}, {pipeline_mode = #tpu.pipeline_mode<synchronous>, transform_indices = @transform_4, window_bounds = array<i64: 256, 128>}, {pipeline_mode = #tpu.pipeline_mode<synchronous>, transform_indices = @transform_5, window_bounds = array<i64: 1, 128>}, {transform_indices = @transform_6, window_bounds = array<i64: 128, 128>}]} {
    %c0 = arith.constant 0 : index
    %c0_0 = arith.constant 0 : index
    %0 = vector.load %arg1[%c0, %c0_0] : memref<128x128xf32, #tpu.memory_space<vmem>>, vector<128x128xf32>
    %c0_1 = arith.constant 0 : index
    %c0_2 = arith.constant 0 : index
    %1 = vector.load %arg2[%c0_1, %c0_2] : memref<128x128xf32, #tpu.memory_space<vmem>>, vector<128x128xf32>
    %c0_3 = arith.constant 0 : index
    %c0_4 = arith.constant 0 : index
    %2 = vector.load %arg3[%c0_3, %c0_4] : memref<128x256xf32, #tpu.memory_space<vmem>>, vector<128x256xf32>
    %cst = arith.constant dense<0.000000e+00> : vector<128x256xf32>
    %3 = tpu.matmul %0, %2, %cst {dimension_numbers = #tpu.dot_dimension_numbers<[1], [0], [0], [1], [0, 0, 1, 1], [], []>} : vector<128x128xf32>, vector<128x256xf32>, vector<128x256xf32> -> vector<128x256xf32>
    %c0_5 = arith.constant 0 : index
    %c0_6 = arith.constant 0 : index
    %4 = vector.load %arg4[%c0_5, %c0_6] : memref<128x256xf32, #tpu.memory_space<vmem>>, vector<128x256xf32>
    %cst_7 = arith.constant dense<0.000000e+00> : vector<128x256xf32>
    %5 = tpu.matmul %1, %4, %cst_7 {dimension_numbers = #tpu.dot_dimension_numbers<[1], [0], [0], [1], [0, 0, 1, 1], [], []>} : vector<128x128xf32>, vector<128x256xf32>, vector<128x256xf32> -> vector<128x256xf32>
    %6 = arith.addf %3, %5 : vector<128x256xf32>
    %cst_8 = arith.constant 0.000000e+00 : f32
    %7 = vector.broadcast %cst_8 : f32 to vector<128x256xf32>
    %8 = arith.cmpf ogt, %6, %7 : vector<128x256xf32>
    %cst_9 = arith.constant 2.000000e-01 : f32
    %9 = vector.broadcast %cst_9 : f32 to vector<128x256xf32>
    %10 = arith.mulf %9, %6 : vector<128x256xf32>
    %11 = arith.select %8, %6, %10 : vector<128x256xi1>, vector<128x256xf32>
    %c0_10 = arith.constant 0 : index
    %c0_11 = arith.constant 0 : index
    %12 = vector.load %arg5[%c0_10, %c0_11] : memref<256x128xf32, #tpu.memory_space<vmem>>, vector<256x128xf32>
    %cst_12 = arith.constant dense<0.000000e+00> : vector<128x128xf32>
    %13 = tpu.matmul %11, %12, %cst_12 {dimension_numbers = #tpu.dot_dimension_numbers<[1], [0], [0], [1], [0, 0, 1, 1], [], []>} : vector<128x256xf32>, vector<256x128xf32>, vector<128x128xf32> -> vector<128x128xf32>
    %14 = arith.subf %0, %1 : vector<128x128xf32>
    %c0_13 = arith.constant 0 : index
    %c0_14 = arith.constant 0 : index
    %15 = vector.load %arg6[%c0_13, %c0_14] : memref<1x128xf32, #tpu.memory_space<vmem>>, vector<1x128xf32>
    %16 = vector.broadcast %15 : vector<1x128xf32> to vector<128x128xf32>
    %17 = arith.addf %14, %16 : vector<128x128xf32>
    %18 = arith.addf %17, %13 : vector<128x128xf32>
    %c0_15 = arith.constant 0 : index
    %c0_16 = arith.constant 0 : index
    %19 = vector.load %arg7[%c0_15, %c0_16] : memref<128x128xf32, #tpu.memory_space<vmem>>, vector<128x128xf32>
    tpu.vector_store %arg7[%c0_15, %c0_16], %18 {strides = array<i32>} : memref<128x128xf32, #tpu.memory_space<vmem>>, vector<128x128xf32>,
    return
  }
  func.func @transform_0(%arg0: i32) -> (i32, i32) {
    %c0_i32 = arith.constant 0 : i32
    %c0_i32_0 = arith.constant 0 : i32
    return %arg0, %c0_i32 : i32, i32
  }
  func.func @transform_1(%arg0: i32) -> (i32, i32) {
    %c0_i32 = arith.constant 0 : i32
    %c0_i32_0 = arith.constant 0 : i32
    return %arg0, %c0_i32 : i32, i32
  }
  func.func @transform_2(%arg0: i32) -> (i32, i32) {
    %c0_i32 = arith.constant 0 : i32
    %c0_i32_0 = arith.constant 0 : i32
    %c0_i32_1 = arith.constant 0 : i32
    return %c0_i32, %c0_i32_0 : i32, i32
  }
  func.func @transform_3(%arg0: i32) -> (i32, i32) {
    %c0_i32 = arith.constant 0 : i32
    %c0_i32_0 = arith.constant 0 : i32
    %c0_i32_1 = arith.constant 0 : i32
    return %c0_i32, %c0_i32_0 : i32, i32
  }
  func.func @transform_4(%arg0: i32) -> (i32, i32) {
    %c0_i32 = arith.constant 0 : i32
    %c0_i32_0 = arith.constant 0 : i32
    %c0_i32_1 = arith.constant 0 : i32
    return %c0_i32, %c0_i32_0 : i32, i32
  }
  func.func @transform_5(%arg0: i32) -> (i32, i32) {
    %c0_i32 = arith.constant 0 : i32
    %c0_i32_0 = arith.constant 0 : i32
    %c0_i32_1 = arith.constant 0 : i32
    return %c0_i32, %c0_i32_0 : i32, i32
  }
  func.func @transform_6(%arg0: i32) -> (i32, i32) {
    %c0_i32 = arith.constant 0 : i32
    %c0_i32_0 = arith.constant 0 : i32
    return %arg0, %c0_i32 : i32, i32
  }
}

</mosaic_0001>

<llo_original>
// kernel: tpu_custom_call.1
$region0: #{tpu_custom_call.1}
  #allocation0 [shape = 'u32[]', space=smem, size = 0x4, offset = 0x4, fixed_abs, tag = 'smem constant byte address 0x4 - core index']
  #allocation1 [shape = 'u32[144,128]{1,0:T(1,128)}', space=vmem, size = 0x12000, scoped, tag = 'internal scratch']
  %s0 = inlined_call_operand.hbm [shape: f32[128,128], index: 0, kind: input, shape index: {}]
  %s1 = inlined_call_operand.hbm [shape: f32[128,128], index: 1, kind: input, shape index: {}]
  %s2 = inlined_call_operand.hbm [shape: f32[128,256], index: 2, kind: input, shape index: {}]
  %s3 = inlined_call_operand.hbm [shape: f32[128,256], index: 3, kind: input, shape index: {}]
  %s4 = inlined_call_operand.hbm [shape: f32[256,128], index: 4, kind: input, shape index: {}]
  %s5 = inlined_call_operand.vmem [shape: f32[1,128], index: 5, kind: input, shape index: {}]
  %s6 = inlined_call_operand.hbm [shape: f32[128,128], index: 6, kind: output, shape index: {}]
  %s7 = sld [smem:[#allocation0]]
  $region54: #{tpu_custom_call.1} parent=0
    _
  %s9 = ssub.s32 1, %s7
  %s10 = scalar_select 0, %s9, %s7
  $region1: #{tpu_custom_call.1} parent=0
    #allocation2 [shape = 'u8[65536]{0}', space=vmem, size = 0x10000, scoped, tag = 'input window, operand 0, single buffered']
    #allocation3 [shape = 's32[1]{0}', space=sflag, size = 0x4, scoped, tag = 'scoped memory for tpu_custom_call.1']
    #allocation4 [shape = 's32[1]{0}', space=sflag, size = 0x4, scoped, tag = 'scoped memory for tpu_custom_call.1']
    #allocation5 [shape = 'u8[65536]{0}', space=vmem, size = 0x10000, scoped, tag = 'input window, operand 1, single buffered']
    #allocation6 [shape = 's32[1]{0}', space=sflag, size = 0x4, scoped, tag = 'scoped memory for tpu_custom_call.1']
    #allocation7 [shape = 'u8[131072]{0}', space=vmem, size = 0x20000, scoped, tag = 'input window, operand 2, single buffered']
    #allocation8 [shape = 'u8[131072]{0}', space=vmem, size = 0x20000, scoped, tag = 'input window, operand 3, single buffered']
    #allocation9 [shape = 's32[1]{0}', space=sflag, size = 0x4, scoped, tag = 'scoped memory for tpu_custom_call.1']
    #allocation10 [shape = 'u8[131072]{0}', space=vmem, size = 0x20000, scoped, tag = 'input window, operand 4, single buffered']
    #allocation11 [shape = 'u8[65536]{0}', space=vmem, size = 0x10000, scoped, tag = 'output window, operand 0, single buffered']
    %11 = vsyncpa [#allocation3], 0
    %12 = vsyncpa [#allocation6], 0
    %13 = vsyncpa [#allocation9], 0
    %14 = vsyncpa [#allocation4], 0
    // Predicated region
    $region2: #{tpu_custom_call.1} parent=1 // pred_check
      _
    $region3: #{tpu_custom_call.1} parent=1 // pred_check_branch
      %16 = sbr.rel (0) target = $region5
    $region4: #{tpu_custom_call.1} parent=1 // pred_region
      %s18 = ssub.s32 2048, 2048
      %19 = vsyncadd [#allocation3], %s18
      %s20 = sshll.u32 [#allocation2], 4
      %s21 = int_to_ptr.vmem [resolvable:$true] %s20
      %26 = dma.hbm_to_vmem [thread:$0]  %s0, 2048, %s21, [#allocation3], 128, 128, 8
    $region5: #{tpu_custom_call.1} parent=1 // pred_fallthru
      _
    // Predicated region
    $region6: #{tpu_custom_call.1} parent=1 // pred_check
      _
    $region7: #{tpu_custom_call.1} parent=1 // pred_check_branch
      %28 = sbr.rel (0) target = $region9
    $region8: #{tpu_custom_call.1} parent=1 // pred_region
      %s30 = ssub.s32 2048, 2048
      %31 = vsyncadd [#allocation6], %s30
      %s32 = sshll.u32 [#allocation5], 4
      %s33 = int_to_ptr.vmem [resolvable:$true] %s32
      %38 = dma.hbm_to_vmem [thread:$0]  %s1, 2048, %s33, [#allocation6], 128, 128, 8
    $region9: #{tpu_custom_call.1} parent=1 // pred_fallthru
      _
    // Predicated region
    $region10: #{tpu_custom_call.1} parent=1 // pred_check
      _
    $region11: #{tpu_custom_call.1} parent=1 // pred_check_branch
      %40 = sbr.rel (0) target = $region13
    $region12: #{tpu_custom_call.1} parent=1 // pred_region
      %s42 = ssub.s32 4096, 4096
      %43 = vsyncadd [#allocation6], %s42
      %s44 = sshll.u32 [#allocation7], 4
      %s45 = int_to_ptr.vmem [resolvable:$true] %s44
      %50 = dma.hbm_to_vmem [thread:$0]  %s2, 4096, %s45, [#allocation6], 256, 256, 16
    $region13: #{tpu_custom_call.1} parent=1 // pred_fallthru
      _
    // Predicated region
    $region14: #{tpu_custom_call.1} parent=1 // pred_check
      _
    $region15: #{tpu_custom_call.1} parent=1 // pred_check_branch
      %52 = sbr.rel (0) target = $region17
    $region16: #{tpu_custom_call.1} parent=1 // pred_region
      %s54 = ssub.s32 4096, 4096
      %55 = vsyncadd [#allocation9], %s54
      %s56 = sshll.u32 [#allocation8], 4
      %s57 = int_to_ptr.vmem [resolvable:$true] %s56
      %62 = dma.hbm_to_vmem [thread:$0]  %s3, 4096, %s57, [#allocation9], 256, 256, 16
    $region17: #{tpu_custom_call.1} parent=1 // pred_fallthru
      _
    // Predicated region
    $region18: #{tpu_custom_call.1} parent=1 // pred_check
      _
    $region19: #{tpu_custom_call.1} parent=1 // pred_check_branch
      %64 = sbr.rel (0) target = $region21
    $region20: #{tpu_custom_call.1} parent=1 // pred_region
      %s66 = ssub.s32 4096, 4096
      %67 = vsyncadd [#allocation9], %s66
      %s68 = sshll.u32 [#allocation10], 4
      %s69 = int_to_ptr.vmem [resolvable:$true] %s68
      %74 = dma.hbm_to_vmem [thread:$0]  %s4, 4096, %s69, [#allocation9], 128, 128, 8
    $region21: #{tpu_custom_call.1} parent=1 // pred_fallthru
      _
    // Predicated region
    $region22: #{tpu_custom_call.1} parent=1 // pred_check
      _
    $region23: #{tpu_custom_call.1} parent=1 // pred_check_branch
      %76 = sbr.rel (0) target = $region25
    $region24: #{tpu_custom_call.1} parent=1 // pred_region
      _
    $region25: #{tpu_custom_call.1} parent=1 // pred_fallthru
      _
    // Predicated region
    $region26: #{tpu_custom_call.1} parent=1 // pred_check
      _
    $region27: #{tpu_custom_call.1} parent=1 // pred_check_branch
      %78 = sbr.rel (0) target = $region29
    $region28: #{tpu_custom_call.1} parent=1 // pred_region
      %79 = dma.done [#allocation3], 2048
    $region29: #{tpu_custom_call.1} parent=1 // pred_fallthru
      _
    // Predicated region
    $region30: #{tpu_custom_call.1} parent=1 // pred_check
      _
    $region31: #{tpu_custom_call.1} parent=1 // pred_check_branch
      %81 = sbr.rel (0) target = $region33
    $region32: #{tpu_custom_call.1} parent=1 // pred_region
      %82 = dma.done [#allocation6], 2048
    $region33: #{tpu_custom_call.1} parent=1 // pred_fallthru
      _
    // Predicated region
    $region34: #{tpu_custom_call.1} parent=1 // pred_check
      _
    $region35: #{tpu_custom_call.1} parent=1 // pred_check_branch
      %84 = sbr.rel (0) target = $region37
    $region36: #{tpu_custom_call.1} parent=1 // pred_region
      %85 = dma.done [#allocation6], 4096
    $region37: #{tpu_custom_call.1} parent=1 // pred_fallthru
      _
    // Predicated region
    $region38: #{tpu_custom_call.1} parent=1 // pred_check
      _
    $region39: #{tpu_custom_call.1} parent=1 // pred_check_branch
      %87 = sbr.rel (0) target = $region41
    $region40: #{tpu_custom_call.1} parent=1 // pred_region
      %88 = dma.done [#allocation9], 4096
    $region41: #{tpu_custom_call.1} parent=1 // pred_fallthru
      _
    // Predicated region
    $region42: #{tpu_custom_call.1} parent=1 // pred_check
      _
    $region43: #{tpu_custom_call.1} parent=1 // pred_check_branch
      %90 = sbr.rel (0) target = $region45
    $region44: #{tpu_custom_call.1} parent=1 // pred_region
      %91 = dma.done [#allocation9], 4096
    $region45: #{tpu_custom_call.1} parent=1 // pred_fallthru
      _
    %v92 = vld [vmem:[#allocation2] sm:$0xff]
    %v93 = vld [vmem:[#allocation2 + $0x8] sm:$0xff]
    %v94 = vld [vmem:[#allocation2 + $0x10] sm:$0xff]
    %v95 = vld [vmem:[#allocation2 + $0x18] sm:$0xff]
    %v96 = vld [vmem:[#allocation2 + $0x20] sm:$0xff]
    %v97 = vld [vmem:[#allocation2 + $0x28] sm:$0xff]
    %v98 = vld [vmem:[#allocation2 + $0x30] sm:$0xff]
    %v99 = vld [vmem:[#allocation2 + $0x38] sm:$0xff]
    %v100 = vld [vmem:[#allocation2 + $0x40] sm:$0xff]
    %v101 = vld [vmem:[#allocation2 + $0x48] sm:$0xff]
    %v102 = vld [vmem:[#allocation2 + $0x50] sm:$0xff]
    %v103 = vld [vmem:[#allocation2 + $0x58] sm:$0xff]
    %v104 = vld [vmem:[#allocation2 + $0x60] sm:$0xff]
    %v105 = vld [vmem:[#allocation2 + $0x68] sm:$0xff]
    %v106 = vld [vmem:[#allocation2 + $0x70] sm:$0xff]
    %v107 = vld [vmem:[#allocation2 + $0x78] sm:$0xff]
    %v108 = vld [vmem:[#allocation5] sm:$0xff]
    %v109 = vld [vmem:[#allocation5 + $0x8] sm:$0xff]
    %v110 = vld [vmem:[#allocation5 + $0x10] sm:$0xff]
    %v111 = vld [vmem:[#allocation5 + $0x18] sm:$0xff]
    %v112 = vld [vmem:[#allocation5 + $0x20] sm:$0xff]
    %v113 = vld [vmem:[#allocation5 + $0x28] sm:$0xff]
    %v114 = vld [vmem:[#allocation5 + $0x30] sm:$0xff]
    %v115 = vld [vmem:[#allocation5 + $0x38] sm:$0xff]
    %v116 = vld [vmem:[#allocation5 + $0x40] sm:$0xff]
    %v117 = vld [vmem:[#allocation5 + $0x48] sm:$0xff]
    %v118 = vld [vmem:[#allocation5 + $0x50] sm:$0xff]
    %v119 = vld [vmem:[#allocation5 + $0x58] sm:$0xff]
    %v120 = vld [vmem:[#allocation5 + $0x60] sm:$0xff]
    %v121 = vld [vmem:[#allocation5 + $0x68] sm:$0xff]
    %v122 = vld [vmem:[#allocation5 + $0x70] sm:$0xff]
    %v123 = vld [vmem:[#allocation5 + $0x78] sm:$0xff]
    %v124 = vld [vmem:[#allocation7] sm:$0xff]
    %v125 = vld [vmem:[#allocation7 + $0x8] sm:$0xff]
    %v126 = vld [vmem:[#allocation7 + $0x10] sm:$0xff]
    %v127 = vld [vmem:[#allocation7 + $0x18] sm:$0xff]
    %v128 = vld [vmem:[#allocation7 + $0x20] sm:$0xff]
    %v129 = vld [vmem:[#allocation7 + $0x28] sm:$0xff]
    %v130 = vld [vmem:[#allocation7 + $0x30] sm:$0xff]
    %v131 = vld [vmem:[#allocation7 + $0x38] sm:$0xff]
    %v132 = vld [vmem:[#allocation7 + $0x40] sm:$0xff]
    %v133 = vld [vmem:[#allocation7 + $0x48] sm:$0xff]
    %v134 = vld [vmem:[#allocation7 + $0x50] sm:$0xff]
    %v135 = vld [vmem:[#allocation7 + $0x58] sm:$0xff]
    %v136 = vld [vmem:[#allocation7 + $0x60] sm:$0xff]
    %v137 = vld [vmem:[#allocation7 + $0x68] sm:$0xff]
    %v138 = vld [vmem:[#allocation7 + $0x70] sm:$0xff]
    %v139 = vld [vmem:[#allocation7 + $0x78] sm:$0xff]
    %v140 = vld [vmem:[#allocation7 + $0x80] sm:$0xff]
    %v141 = vld [vmem:[#allocation7 + $0x88] sm:$0xff]
    %v142 = vld [vmem:[#allocation7 + $0x90] sm:$0xff]
    %v143 = vld [vmem:[#allocation7 + $0x98] sm:$0xff]
    %v144 = vld [vmem:[#allocation7 + $0xa0] sm:$0xff]
    %v145 = vld [vmem:[#allocation7 + $0xa8] sm:$0xff]
    %v146 = vld [vmem:[#allocation7 + $0xb0] sm:$0xff]
    %v147 = vld [vmem:[#allocation7 + $0xb8] sm:$0xff]
    %v148 = vld [vmem:[#allocation7 + $0xc0] sm:$0xff]
    %v149 = vld [vmem:[#allocation7 + $0xc8] sm:$0xff]
    %v150 = vld [vmem:[#allocation7 + $0xd0] sm:$0xff]
    %v151 = vld [vmem:[#allocation7 + $0xd8] sm:$0xff]
    %v152 = vld [vmem:[#allocation7 + $0xe0] sm:$0xff]
    %v153 = vld [vmem:[#allocation7 + $0xe8] sm:$0xff]
    %v154 = vld [vmem:[#allocation7 + $0xf0] sm:$0xff]
    %v155 = vld [vmem:[#allocation7 + $0xf8] sm:$0xff]
    %v156 = vld [vmem:[#allocation8] sm:$0xff]
    %v157 = vld [vmem:[#allocation8 + $0x8] sm:$0xff]
    %v158 = vld [vmem:[#allocation8 + $0x10] sm:$0xff]
    %v159 = vld [vmem:[#allocation8 + $0x18] sm:$0xff]
    %v160 = vld [vmem:[#allocation8 + $0x20] sm:$0xff]
    %v161 = vld [vmem:[#allocation8 + $0x28] sm:$0xff]
    %v162 = vld [vmem:[#allocation8 + $0x30] sm:$0xff]
    %v163 = vld [vmem:[#allocation8 + $0x38] sm:$0xff]
    %v164 = vld [vmem:[#allocation8 + $0x40] sm:$0xff]
    %v165 = vld [vmem:[#allocation8 + $0x48] sm:$0xff]
    %v166 = vld [vmem:[#allocation8 + $0x50] sm:$0xff]
    %v167 = vld [vmem:[#allocation8 + $0x58] sm:$0xff]
    %v168 = vld [vmem:[#allocation8 + $0x60] sm:$0xff]
    %v169 = vld [vmem:[#allocation8 + $0x68] sm:$0xff]
    %v170 = vld [vmem:[#allocation8 + $0x70] sm:$0xff]
    %v171 = vld [vmem:[#allocation8 + $0x78] sm:$0xff]
    %v172 = vld [vmem:[#allocation8 + $0x80] sm:$0xff]
    %v173 = vld [vmem:[#allocation8 + $0x88] sm:$0xff]
    %v174 = vld [vmem:[#allocation8 + $0x90] sm:$0xff]
    %v175 = vld [vmem:[#allocation8 + $0x98] sm:$0xff]
    %v176 = vld [vmem:[#allocation8 + $0xa0] sm:$0xff]
    %v177 = vld [vmem:[#allocation8 + $0xa8] sm:$0xff]
    %v178 = vld [vmem:[#allocation8 + $0xb0] sm:$0xff]
    %v179 = vld [vmem:[#allocation8 + $0xb8] sm:$0xff]
    %v180 = vld [vmem:[#allocation8 + $0xc0] sm:$0xff]
    %v181 = vld [vmem:[#allocation8 + $0xc8] sm:$0xff]
    %v182 = vld [vmem:[#allocation8 + $0xd0] sm:$0xff]
    %v183 = vld [vmem:[#allocation8 + $0xd8] sm:$0xff]
    %v184 = vld [vmem:[#allocation8 + $0xe0] sm:$0xff]
    %v185 = vld [vmem:[#allocation8 + $0xe8] sm:$0xff]
    %v186 = vld [vmem:[#allocation8 + $0xf0] sm:$0xff]
    %v187 = vld [vmem:[#allocation8 + $0xf8] sm:$0xff]
    %188 = vmatprep.subr.mxu0 %v157
    %189 = vmatpush1.msra.mxu0 %v156
    %190 = vmatprep.subr.mxu0 %v159
    %191 = vmatpush1.msra.mxu0 %v158
    %192 = vmatprep.subr.mxu0 %v161
    %193 = vmatpush1.msra.mxu0 %v160
    %194 = vmatprep.subr.mxu0 %v163
    %195 = vmatpush1.msra.mxu0 %v162
    %196 = vmatprep.subr.mxu0 %v165
    %197 = vmatpush1.msra.mxu0 %v164
    %198 = vmatprep.subr.mxu0 %v167
    %199 = vmatpush1.msra.mxu0 %v166
    %200 = vmatprep.subr.mxu0 %v169
    %201 = vmatpush1.msra.mxu0 %v168
    %202 = vmatprep.subr.mxu0 %v171
    %203 = vmatpush1.msra.mxu0 %v170
    %204 = vmatprep.subr.mxu0 %v173
    %205 = vmatpush1.msra.mxu0 %v172
    %206 = vmatprep.subr.mxu0 %v175
    %207 = vmatpush1.msra.mxu0 %v174
    %208 = vmatprep.subr.mxu0 %v177
    %209 = vmatpush1.msra.mxu0 %v176
    %210 = vmatprep.subr.mxu0 %v179
    %211 = vmatpush1.msra.mxu0 %v178
    %212 = vmatprep.subr.mxu0 %v181
    %213 = vmatpush1.msra.mxu0 %v180
    %214 = vmatprep.subr.mxu0 %v183
    %215 = vmatpush1.msra.mxu0 %v182
    %216 = vmatprep.subr.mxu0 %v185
    %217 = vmatpush1.msra.mxu0 %v184
    %218 = vmatprep.subr.mxu0 %v187
    %219 = vmatpush1.msra.mxu0 %v186
    %220 = vmatprep.subr.mxu0 0.0
    %221 = vmatpush1.msra.mxu0 0.0
    %222 = vmatprep.subr.mxu0 0.0
    %223 = vmatpush1.msra.mxu0 0.0
    %224 = vmatprep.subr.mxu0 0.0
    %225 = vmatpush1.msra.mxu0 0.0
    %226 = vmatprep.subr.mxu0 0.0
    %227 = vmatpush1.msra.mxu0 0.0
    %228 = vmatprep.subr.mxu0 0.0
    %229 = vmatpush1.msra.mxu0 0.0
    %230 = vmatprep.subr.mxu0 0.0
    %231 = vmatpush1.msra.mxu0 0.0
    %232 = vmatprep.subr.mxu0 0.0
    %233 = vmatpush1.msra.mxu0 0.0
    %234 = vmatprep.subr.mxu0 0.0
    %235 = vmatpush1.msra.mxu0 0.0
    %236 = vmatprep.subr.mxu0 0.0
    %237 = vmatpush1.msra.mxu0 0.0
    %238 = vmatprep.subr.mxu0 0.0
    %239 = vmatpush1.msra.mxu0 0.0
    %240 = vmatprep.subr.mxu0 0.0
    %241 = vmatpush1.msra.mxu0 0.0
    %242 = vmatprep.subr.mxu0 0.0
    %243 = vmatpush1.msra.mxu0 0.0
    %244 = vmatprep.subr.mxu0 0.0
    %245 = vmatpush1.msra.mxu0 0.0
    %246 = vmatprep.subr.mxu0 0.0
    %247 = vmatpush1.msra.mxu0 0.0
    %248 = vmatprep.subr.mxu0 0.0
    %249 = vmatpush1.msra.mxu0 0.0
    %250 = vmatprep.subr.mxu0 0.0
    %251 = vmatpush1.msra.mxu0 0.0
    %252 = vmatprep.mubr.f32.mxu0 0.0
    %253 = vmatmul.mubr.f32.gmra.mrb[0].mxu0 %v108
    %v254 = vpop.f32.mrb[0].mxu0
    %v255 = vadd.f32 0.0, %v254
    %v256 = vpop.f32.mrb[0].mxu0
    %v257 = vadd.f32 0.0, %v256
    %258 = vmatprep.mubr.f32.mxu0 0.0
    %259 = vmatmul.mubr.f32.gmra.mrb[0].mxu0 %v109
    %v260 = vpop.f32.mrb[0].mxu0
    %v261 = vadd.f32 0.0, %v260
    %v262 = vpop.f32.mrb[0].mxu0
    %v263 = vadd.f32 0.0, %v262
    %264 = vmatprep.mubr.f32.mxu0 0.0
    %265 = vmatmul.mubr.f32.gmra.mrb[0].mxu0 %v110
    %v266 = vpop.f32.mrb[0].mxu0
    %v267 = vadd.f32 0.0, %v266
    %v268 = vpop.f32.mrb[0].mxu0
    %v269 = vadd.f32 0.0, %v268
    %270 = vmatprep.mubr.f32.mxu0 0.0
    %271 = vmatmul.mubr.f32.gmra.mrb[0].mxu0 %v111
    %v272 = vpop.f32.mrb[0].mxu0
    %v273 = vadd.f32 0.0, %v272
    %v274 = vpop.f32.mrb[0].mxu0
    %v275 = vadd.f32 0.0, %v274
    %276 = vmatprep.mubr.f32.mxu0 0.0
    %277 = vmatmul.mubr.f32.gmra.mrb[0].mxu0 %v112
    %v278 = vpop.f32.mrb[0].mxu0
    %v279 = vadd.f32 0.0, %v278
    %v280 = vpop.f32.mrb[0].mxu0
    %v281 = vadd.f32 0.0, %v280
    %282 = vmatprep.mubr.f32.mxu0 0.0
    %283 = vmatmul.mubr.f32.gmra.mrb[0].mxu0 %v113
    %v284 = vpop.f32.mrb[0].mxu0
    %v285 = vadd.f32 0.0, %v284
    %v286 = vpop.f32.mrb[0].mxu0
    %v287 = vadd.f32 0.0, %v286
    %288 = vmatprep.mubr.f32.mxu0 0.0
    %289 = vmatmul.mubr.f32.gmra.mrb[0].mxu0 %v114
    %v290 = vpop.f32.mrb[0].mxu0
    %v291 = vadd.f32 0.0, %v290
    %v292 = vpop.f32.mrb[0].mxu0
    %v293 = vadd.f32 0.0, %v292
    %294 = vmatprep.mubr.f32.mxu0 0.0
    %295 = vmatmul.mubr.f32.gmra.mrb[0].mxu0 %v115
    %v296 = vpop.f32.mrb[0].mxu0
    %v297 = vadd.f32 0.0, %v296
    %v298 = vpop.f32.mrb[0].mxu0
    %v299 = vadd.f32 0.0, %v298
    %300 = vmatprep.mubr.f32.mxu0 0.0
    %301 = vmatmul.mubr.f32.gmra.mrb[0].mxu0 %v116
    %v302 = vpop.f32.mrb[0].mxu0
    %v303 = vadd.f32 0.0, %v302
    %v304 = vpop.f32.mrb[0].mxu0
    %v305 = vadd.f32 0.0, %v304
    %306 = vmatprep.mubr.f32.mxu0 0.0
    %307 = vmatmul.mubr.f32.gmra.mrb[0].mxu0 %v117
    %v308 = vpop.f32.mrb[0].mxu0
    %v309 = vadd.f32 0.0, %v308
    %v310 = vpop.f32.mrb[0].mxu0
    %v311 = vadd.f32 0.0, %v310
    %312 = vmatprep.mubr.f32.mxu0 0.0
    %313 = vmatmul.mubr.f32.gmra.mrb[0].mxu0 %v118
    %v314 = vpop.f32.mrb[0].mxu0
    %v315 = vadd.f32 0.0, %v314
    %v316 = vpop.f32.mrb[0].mxu0
    %v317 = vadd.f32 0.0, %v316
    %318 = vmatprep.mubr.f32.mxu0 0.0
    %319 = vmatmul.mubr.f32.gmra.mrb[0].mxu0 %v119
    %v320 = vpop.f32.mrb[0].mxu0
    %v321 = vadd.f32 0.0, %v320
    %v322 = vpop.f32.mrb[0].mxu0
    %v323 = vadd.f32 0.0, %v322
    %324 = vmatprep.mubr.f32.mxu0 0.0
    %325 = vmatmul.mubr.f32.gmra.mrb[0].mxu0 %v120
    %v326 = vpop.f32.mrb[0].mxu0
    %v327 = vadd.f32 0.0, %v326
    %v328 = vpop.f32.mrb[0].mxu0
    %v329 = vadd.f32 0.0, %v328
    %330 = vmatprep.mubr.f32.mxu0 0.0
    %331 = vmatmul.mubr.f32.gmra.mrb[0].mxu0 %v121
    %v332 = vpop.f32.mrb[0].mxu0
    %v333 = vadd.f32 0.0, %v332
    %v334 = vpop.f32.mrb[0].mxu0
    %v335 = vadd.f32 0.0, %v334
    %336 = vmatprep.mubr.f32.mxu0 0.0
    %337 = vmatmul.mubr.f32.gmra.mrb[0].mxu0 %v122
    %v338 = vpop.f32.mrb[0].mxu0
    %v339 = vadd.f32 0.0, %v338
    %v340 = vpop.f32.mrb[0].mxu0
    %v341 = vadd.f32 0.0, %v340
    %342 = vmatprep.mubr.f32.mxu0 0.0
    %343 = vmatmul.mubr.f32.gmra.mrb[0].mxu0 %v123
    %v344 = vpop.f32.mrb[0].mxu0
    %v345 = vadd.f32 0.0, %v344
    %v346 = vpop.f32.mrb[0].mxu0
    %v347 = vadd.f32 0.0, %v346
    %348 = vdwg.mxu0
    %349 = vmatprep.subr.mxu0 %v125
    %350 = vmatpush1.msra.mxu0 %v124
    %351 = vmatprep.subr.mxu0 %v127
    %352 = vmatpush1.msra.mxu0 %v126
    %353 = vmatprep.subr.mxu0 %v129
    %354 = vmatpush1.msra.mxu0 %v128
    %355 = vmatprep.subr.mxu0 %v131
    %356 = vmatpush1.msra.mxu0 %v130
    %357 = vmatprep.subr.mxu0 %v133
    %358 = vmatpush1.msra.mxu0 %v132
    %359 = vmatprep.subr.mxu0 %v135
    %360 = vmatpush1.msra.mxu0 %v134
    %361 = vmatprep.subr.mxu0 %v137
    %362 = vmatpush1.msra.mxu0 %v136
    %363 = vmatprep.subr.mxu0 %v139
    %364 = vmatpush1.msra.mxu0 %v138
    %365 = vmatprep.subr.mxu0 %v141
    %366 = vmatpush1.msra.mxu0 %v140
    %367 = vmatprep.subr.mxu0 %v143
    %368 = vmatpush1.msra.mxu0 %v142
    %369 = vmatprep.subr.mxu0 %v145
    %370 = vmatpush1.msra.mxu0 %v144
    %371 = vmatprep.subr.mxu0 %v147
    %372 = vmatpush1.msra.mxu0 %v146
    %373 = vmatprep.subr.mxu0 %v149
    %374 = vmatpush1.msra.mxu0 %v148
    %375 = vmatprep.subr.mxu0 %v151
    %376 = vmatpush1.msra.mxu0 %v150
    %377 = vmatprep.subr.mxu0 %v153
    %378 = vmatpush1.msra.mxu0 %v152
    %379 = vmatprep.subr.mxu0 %v155
    %380 = vmatpush1.msra.mxu0 %v154
    %381 = vmatprep.subr.mxu0 0.0
    %382 = vmatpush1.msra.mxu0 0.0
    %383 = vmatprep.subr.mxu0 0.0
    %384 = vmatpush1.msra.mxu0 0.0
    %385 = vmatprep.subr.mxu0 0.0
    %386 = vmatpush1.msra.mxu0 0.0
    %387 = vmatprep.subr.mxu0 0.0
    %388 = vmatpush1.msra.mxu0 0.0
    %389 = vmatprep.subr.mxu0 0.0
    %390 = vmatpush1.msra.mxu0 0.0
    %391 = vmatprep.subr.mxu0 0.0
    %392 = vmatpush1.msra.mxu0 0.0
    %393 = vmatprep.subr.mxu0 0.0
    %394 = vmatpush1.msra.mxu0 0.0
    %395 = vmatprep.subr.mxu0 0.0
    %396 = vmatpush1.msra.mxu0 0.0
    %397 = vmatprep.subr.mxu0 0.0
    %398 = vmatpush1.msra.mxu0 0.0
    %399 = vmatprep.subr.mxu0 0.0
    %400 = vmatpush1.msra.mxu0 0.0
    %401 = vmatprep.subr.mxu0 0.0
    %402 = vmatpush1.msra.mxu0 0.0
    %403 = vmatprep.subr.mxu0 0.0
    %404 = vmatpush1.msra.mxu0 0.0
    %405 = vmatprep.subr.mxu0 0.0
    %406 = vmatpush1.msra.mxu0 0.0
    %407 = vmatprep.subr.mxu0 0.0
    %408 = vmatpush1.msra.mxu0 0.0
    %409 = vmatprep.subr.mxu0 0.0
    %410 = vmatpush1.msra.mxu0 0.0
    %411 = vmatprep.subr.mxu0 0.0
    %412 = vmatpush1.msra.mxu0 0.0
    %413 = vmatprep.mubr.f32.mxu0 0.0
    %414 = vmatmul.mubr.f32.gmra.mrb[0].mxu0 %v92
    %v415 = vpop.f32.mrb[0].mxu0
    %v416 = vadd.f32 %v255, %v415
    %v417 = vpop.f32.mrb[0].mxu0
    %v418 = vadd.f32 %v257, %v417
    %419 = vmatprep.mubr.f32.mxu0 0.0
    %420 = vmatmul.mubr.f32.gmra.mrb[0].mxu0 %v93
    %v421 = vpop.f32.mrb[0].mxu0
    %v422 = vadd.f32 %v261, %v421
    %v423 = vpop.f32.mrb[0].mxu0
    %v424 = vadd.f32 %v263, %v423
    %425 = vmatprep.mubr.f32.mxu0 0.0
    %426 = vmatmul.mubr.f32.gmra.mrb[0].mxu0 %v94
    %v427 = vpop.f32.mrb[0].mxu0
    %v428 = vadd.f32 %v267, %v427
    %v429 = vpop.f32.mrb[0].mxu0
    %v430 = vadd.f32 %v269, %v429
    %431 = vmatprep.mubr.f32.mxu0 0.0
    %432 = vmatmul.mubr.f32.gmra.mrb[0].mxu0 %v95
    %v433 = vpop.f32.mrb[0].mxu0
    %v434 = vadd.f32 %v273, %v433
    %v435 = vpop.f32.mrb[0].mxu0
    %v436 = vadd.f32 %v275, %v435
    %437 = vmatprep.mubr.f32.mxu0 0.0
    %438 = vmatmul.mubr.f32.gmra.mrb[0].mxu0 %v96
    %v439 = vpop.f32.mrb[0].mxu0
    %v440 = vadd.f32 %v279, %v439
    %v441 = vpop.f32.mrb[0].mxu0
    %v442 = vadd.f32 %v281, %v441
    %443 = vmatprep.mubr.f32.mxu0 0.0
    %444 = vmatmul.mubr.f32.gmra.mrb[0].mxu0 %v97
    %v445 = vpop.f32.mrb[0].mxu0
    %v446 = vadd.f32 %v285, %v445
    %v447 = vpop.f32.mrb[0].mxu0
    %v448 = vadd.f32 %v287, %v447
    %449 = vmatprep.mubr.f32.mxu0 0.0
    %450 = vmatmul.mubr.f32.gmra.mrb[0].mxu0 %v98
    %v451 = vpop.f32.mrb[0].mxu0
    %v452 = vadd.f32 %v291, %v451
    %v453 = vpop.f32.mrb[0].mxu0
    %v454 = vadd.f32 %v293, %v453
    %455 = vmatprep.mubr.f32.mxu0 0.0
    %456 = vmatmul.mubr.f32.gmra.mrb[0].mxu0 %v99
    %v457 = vpop.f32.mrb[0].mxu0
    %v458 = vadd.f32 %v297, %v457
    %v459 = vpop.f32.mrb[0].mxu0
    %v460 = vadd.f32 %v299, %v459
    %461 = vmatprep.mubr.f32.mxu0 0.0
    %462 = vmatmul.mubr.f32.gmra.mrb[0].mxu0 %v100
    %v463 = vpop.f32.mrb[0].mxu0
    %v464 = vadd.f32 %v303, %v463
    %v465 = vpop.f32.mrb[0].mxu0
    %v466 = vadd.f32 %v305, %v465
    %467 = vmatprep.mubr.f32.mxu0 0.0
    %468 = vmatmul.mubr.f32.gmra.mrb[0].mxu0 %v101
    %v469 = vpop.f32.mrb[0].mxu0
    %v470 = vadd.f32 %v309, %v469
    %v471 = vpop.f32.mrb[0].mxu0
    %v472 = vadd.f32 %v311, %v471
    %473 = vmatprep.mubr.f32.mxu0 0.0
    %474 = vmatmul.mubr.f32.gmra.mrb[0].mxu0 %v102
    %v475 = vpop.f32.mrb[0].mxu0
    %v476 = vadd.f32 %v315, %v475
    %v477 = vpop.f32.mrb[0].mxu0
    %v478 = vadd.f32 %v317, %v477
    %479 = vmatprep.mubr.f32.mxu0 0.0
    %480 = vmatmul.mubr.f32.gmra.mrb[0].mxu0 %v103
    %v481 = vpop.f32.mrb[0].mxu0
    %v482 = vadd.f32 %v321, %v481
    %v483 = vpop.f32.mrb[0].mxu0
    %v484 = vadd.f32 %v323, %v483
    %485 = vmatprep.mubr.f32.mxu0 0.0
    %486 = vmatmul.mubr.f32.gmra.mrb[0].mxu0 %v104
    %v487 = vpop.f32.mrb[0].mxu0
    %v488 = vadd.f32 %v327, %v487
    %v489 = vpop.f32.mrb[0].mxu0
    %v490 = vadd.f32 %v329, %v489
    %491 = vmatprep.mubr.f32.mxu0 0.0
    %492 = vmatmul.mubr.f32.gmra.mrb[0].mxu0 %v105
    %v493 = vpop.f32.mrb[0].mxu0
    %v494 = vadd.f32 %v333, %v493
    %v495 = vpop.f32.mrb[0].mxu0
    %v496 = vadd.f32 %v335, %v495
    %497 = vmatprep.mubr.f32.mxu0 0.0
    %498 = vmatmul.mubr.f32.gmra.mrb[0].mxu0 %v106
    %v499 = vpop.f32.mrb[0].mxu0
    %v500 = vadd.f32 %v339, %v499
    %v501 = vpop.f32.mrb[0].mxu0
    %v502 = vadd.f32 %v341, %v501
    %503 = vmatprep.mubr.f32.mxu0 0.0
    %504 = vmatmul.mubr.f32.gmra.mrb[0].mxu0 %v107
    %v505 = vpop.f32.mrb[0].mxu0
    %v506 = vadd.f32 %v345, %v505
    %v507 = vpop.f32.mrb[0].mxu0
    %v508 = vadd.f32 %v347, %v507
    %509 = vdwg.mxu0
    %vm510 = vcmp.gt.f32.partialorder %v416, 0.0
    %vm511 = vcmp.gt.f32.partialorder %v418, 0.0
    %vm512 = vcmp.gt.f32.partialorder %v422, 0.0
    %vm513 = vcmp.gt.f32.partialorder %v424, 0.0
    %vm514 = vcmp.gt.f32.partialorder %v428, 0.0
    %vm515 = vcmp.gt.f32.partialorder %v430, 0.0
    %vm516 = vcmp.gt.f32.partialorder %v434, 0.0
    %vm517 = vcmp.gt.f32.partialorder %v436, 0.0
    %vm518 = vcmp.gt.f32.partialorder %v440, 0.0
    %vm519 = vcmp.gt.f32.partialorder %v442, 0.0
    %vm520 = vcmp.gt.f32.partialorder %v446, 0.0
    %vm521 = vcmp.gt.f32.partialorder %v448, 0.0
    %vm522 = vcmp.gt.f32.partialorder %v452, 0.0
    %vm523 = vcmp.gt.f32.partialorder %v454, 0.0
    %vm524 = vcmp.gt.f32.partialorder %v458, 0.0
    %vm525 = vcmp.gt.f32.partialorder %v460, 0.0
    %vm526 = vcmp.gt.f32.partialorder %v464, 0.0
    %vm527 = vcmp.gt.f32.partialorder %v466, 0.0
    %vm528 = vcmp.gt.f32.partialorder %v470, 0.0
    %vm529 = vcmp.gt.f32.partialorder %v472, 0.0
    %vm530 = vcmp.gt.f32.partialorder %v476, 0.0
    %vm531 = vcmp.gt.f32.partialorder %v478, 0.0
    %vm532 = vcmp.gt.f32.partialorder %v482, 0.0
    %vm533 = vcmp.gt.f32.partialorder %v484, 0.0
    %vm534 = vcmp.gt.f32.partialorder %v488, 0.0
    %vm535 = vcmp.gt.f32.partialorder %v490, 0.0
    %vm536 = vcmp.gt.f32.partialorder %v494, 0.0
    %vm537 = vcmp.gt.f32.partialorder %v496, 0.0
    %vm538 = vcmp.gt.f32.partialorder %v500, 0.0
    %vm539 = vcmp.gt.f32.partialorder %v502, 0.0
    %vm540 = vcmp.gt.f32.partialorder %v506, 0.0
    %vm541 = vcmp.gt.f32.partialorder %v508, 0.0
    %v542 = vmul.f32 %v416, 0.2
    %v543 = vmul.f32 %v418, 0.2
    %v544 = vmul.f32 %v422, 0.2
    %v545 = vmul.f32 %v424, 0.2
    %v546 = vmul.f32 %v428, 0.2
    %v547 = vmul.f32 %v430, 0.2
    %v548 = vmul.f32 %v434, 0.2
    %v549 = vmul.f32 %v436, 0.2
    %v550 = vmul.f32 %v440, 0.2
    %v551 = vmul.f32 %v442, 0.2
    %v552 = vmul.f32 %v446, 0.2
    %v553 = vmul.f32 %v448, 0.2
    %v554 = vmul.f32 %v452, 0.2
    %v555 = vmul.f32 %v454, 0.2
    %v556 = vmul.f32 %v458, 0.2
    %v557 = vmul.f32 %v460, 0.2
    %v558 = vmul.f32 %v464, 0.2
    %v559 = vmul.f32 %v466, 0.2
    %v560 = vmul.f32 %v470, 0.2
    %v561 = vmul.f32 %v472, 0.2
    %v562 = vmul.f32 %v476, 0.2
    %v563 = vmul.f32 %v478, 0.2
    %v564 = vmul.f32 %v482, 0.2
    %v565 = vmul.f32 %v484, 0.2
    %v566 = vmul.f32 %v488, 0.2
    %v567 = vmul.f32 %v490, 0.2
    %v568 = vmul.f32 %v494, 0.2
    %v569 = vmul.f32 %v496, 0.2
    %v570 = vmul.f32 %v500, 0.2
    %v571 = vmul.f32 %v502, 0.2
    %v572 = vmul.f32 %v506, 0.2
    %v573 = vmul.f32 %v508, 0.2
    %v574 = vsel %vm510, %v416, %v542
    %v575 = vsel %vm511, %v418, %v543
    %v576 = vsel %vm512, %v422, %v544
    %v577 = vsel %vm513, %v424, %v545
    %v578 = vsel %vm514, %v428, %v546
    %v579 = vsel %vm515, %v430, %v547
    %v580 = vsel %vm516, %v434, %v548
    %v581 = vsel %vm517, %v436, %v549
    %v582 = vsel %vm518, %v440, %v550
    %v583 = vsel %vm519, %v442, %v551
    %v584 = vsel %vm520, %v446, %v552
    %v585 = vsel %vm521, %v448, %v553
    %v586 = vsel %vm522, %v452, %v554
    %v587 = vsel %vm523, %v454, %v555
    %v588 = vsel %vm524, %v458, %v556
    %v589 = vsel %vm525, %v460, %v557
    %v590 = vsel %vm526, %v464, %v558
    %v591 = vsel %vm527, %v466, %v559
    %v592 = vsel %vm528, %v470, %v560
    %v593 = vsel %vm529, %v472, %v561
    %v594 = vsel %vm530, %v476, %v562
    %v595 = vsel %vm531, %v478, %v563
    %v596 = vsel %vm532, %v482, %v564
    %v597 = vsel %vm533, %v484, %v565
    %v598 = vsel %vm534, %v488, %v566
    %v599 = vsel %vm535, %v490, %v567
    %v600 = vsel %vm536, %v494, %v568
    %v601 = vsel %vm537, %v496, %v569
    %v602 = vsel %vm538, %v500, %v570
    %v603 = vsel %vm539, %v502, %v571
    %v604 = vsel %vm540, %v506, %v572
    %v605 = vsel %vm541, %v508, %v573
    %v606 = vld [vmem:[#allocation10] sm:$0xff]
    %v607 = vld [vmem:[#allocation10 + $0x8] sm:$0xff]
    %v608 = vld [vmem:[#allocation10 + $0x10] sm:$0xff]
    %v609 = vld [vmem:[#allocation10 + $0x18] sm:$0xff]
    %v610 = vld [vmem:[#allocation10 + $0x20] sm:$0xff]
    %v611 = vld [vmem:[#allocation10 + $0x28] sm:$0xff]
    %v612 = vld [vmem:[#allocation10 + $0x30] sm:$0xff]
    %v613 = vld [vmem:[#allocation10 + $0x38] sm:$0xff]
    %v614 = vld [vmem:[#allocation10 + $0x40] sm:$0xff]
    %v615 = vld [vmem:[#allocation10 + $0x48] sm:$0xff]
    %v616 = vld [vmem:[#allocation10 + $0x50] sm:$0xff]
    %v617 = vld [vmem:[#allocation10 + $0x58] sm:$0xff]
    %v618 = vld [vmem:[#allocation10 + $0x60] sm:$0xff]
    %v619 = vld [vmem:[#allocation10 + $0x68] sm:$0xff]
    %v620 = vld [vmem:[#allocation10 + $0x70] sm:$0xff]
    %v621 = vld [vmem:[#allocation10 + $0x78] sm:$0xff]
    %v622 = vld [vmem:[#allocation10 + $0x80] sm:$0xff]
    %v623 = vld [vmem:[#allocation10 + $0x88] sm:$0xff]
    %v624 = vld [vmem:[#allocation10 + $0x90] sm:$0xff]
    %v625 = vld [vmem:[#allocation10 + $0x98] sm:$0xff]
    %v626 = vld [vmem:[#allocation10 + $0xa0] sm:$0xff]
    %v627 = vld [vmem:[#allocation10 + $0xa8] sm:$0xff]
    %v628 = vld [vmem:[#allocation10 + $0xb0] sm:$0xff]
    %v629 = vld [vmem:[#allocation10 + $0xb8] sm:$0xff]
    %v630 = vld [vmem:[#allocation10 + $0xc0] sm:$0xff]
    %v631 = vld [vmem:[#allocation10 + $0xc8] sm:$0xff]
    %v632 = vld [vmem:[#allocation10 + $0xd0] sm:$0xff]
    %v633 = vld [vmem:[#allocation10 + $0xd8] sm:$0xff]
    %v634 = vld [vmem:[#allocation10 + $0xe0] sm:$0xff]
    %v635 = vld [vmem:[#allocation10 + $0xe8] sm:$0xff]
    %v636 = vld [vmem:[#allocation10 + $0xf0] sm:$0xff]
    %v637 = vld [vmem:[#allocation10 + $0xf8] sm:$0xff]
    %638 = vmatprep.subr.mxu0 0.0
    %639 = vmatpush1.msra.mxu0 %v606
    %640 = vmatprep.subr.mxu0 0.0
    %641 = vmatpush1.msra.mxu0 %v607
    %642 = vmatprep.subr.mxu0 0.0
    %643 = vmatpush1.msra.mxu0 %v608
    %644 = vmatprep.subr.mxu0 0.0
    %645 = vmatpush1.msra.mxu0 %v609
    %646 = vmatprep.subr.mxu0 0.0
    %647 = vmatpush1.msra.mxu0 %v610
    %648 = vmatprep.subr.mxu0 0.0
    %649 = vmatpush1.msra.mxu0 %v611
    %650 = vmatprep.subr.mxu0 0.0
    %651 = vmatpush1.msra.mxu0 %v612
    %652 = vmatprep.subr.mxu0 0.0
    %653 = vmatpush1.msra.mxu0 %v613
    %654 = vmatprep.subr.mxu0 0.0
    %655 = vmatpush1.msra.mxu0 %v614
    %656 = vmatprep.subr.mxu0 0.0
    %657 = vmatpush1.msra.mxu0 %v615
    %658 = vmatprep.subr.mxu0 0.0
    %659 = vmatpush1.msra.mxu0 %v616
    %660 = vmatprep.subr.mxu0 0.0
    %661 = vmatpush1.msra.mxu0 %v617
    %662 = vmatprep.subr.mxu0 0.0
    %663 = vmatpush1.msra.mxu0 %v618
    %664 = vmatprep.subr.mxu0 0.0
    %665 = vmatpush1.msra.mxu0 %v619
    %666 = vmatprep.subr.mxu0 0.0
    %667 = vmatpush1.msra.mxu0 %v620
    %668 = vmatprep.subr.mxu0 0.0
    %669 = vmatpush1.msra.mxu0 %v621
    %670 = vmatprep.subr.mxu0 0.0
    %671 = vmatpush1.msra.mxu0 %v622
    %672 = vmatprep.subr.mxu0 0.0
    %673 = vmatpush1.msra.mxu0 %v623
    %674 = vmatprep.subr.mxu0 0.0
    %675 = vmatpush1.msra.mxu0 %v624
    %676 = vmatprep.subr.mxu0 0.0
    %677 = vmatpush1.msra.mxu0 %v625
    %678 = vmatprep.subr.mxu0 0.0
    %679 = vmatpush1.msra.mxu0 %v626
    %680 = vmatprep.subr.mxu0 0.0
    %681 = vmatpush1.msra.mxu0 %v627
    %682 = vmatprep.subr.mxu0 0.0
    %683 = vmatpush1.msra.mxu0 %v628
    %684 = vmatprep.subr.mxu0 0.0
    %685 = vmatpush1.msra.mxu0 %v629
    %686 = vmatprep.subr.mxu0 0.0
    %687 = vmatpush1.msra.mxu0 %v630
    %688 = vmatprep.subr.mxu0 0.0
    %689 = vmatpush1.msra.mxu0 %v631
    %690 = vmatprep.subr.mxu0 0.0
    %691 = vmatpush1.msra.mxu0 %v632
    %692 = vmatprep.subr.mxu0 0.0
    %693 = vmatpush1.msra.mxu0 %v633
    %694 = vmatprep.subr.mxu0 0.0
    %695 = vmatpush1.msra.mxu0 %v634
    %696 = vmatprep.subr.mxu0 0.0
    %697 = vmatpush1.msra.mxu0 %v635
    %698 = vmatprep.subr.mxu0 0.0
    %699 = vmatpush1.msra.mxu0 %v636
    %700 = vmatprep.subr.mxu0 0.0
    %701 = vmatpush1.msra.mxu0 %v637
    %702 = vmatprep.mubr.f32.mxu0 %v575
    %703 = vmatmul.mubr.f32.gmra.mrb[0].mxu0 %v574
    %v704 = vpop.f32.mrb[0].mxu0
    %v705 = vadd.f32 0.0, %v704
    %v706 = vpop.f32.mrb[0].mxu0
    %707 = vmatprep.mubr.f32.mxu0 %v577
    %708 = vmatmul.mubr.f32.gmra.mrb[0].mxu0 %v576
    %v709 = vpop.f32.mrb[0].mxu0
    %v710 = vadd.f32 0.0, %v709
    %v711 = vpop.f32.mrb[0].mxu0
    %712 = vmatprep.mubr.f32.mxu0 %v579
    %713 = vmatmul.mubr.f32.gmra.mrb[0].mxu0 %v578
    %v714 = vpop.f32.mrb[0].mxu0
    %v715 = vadd.f32 0.0, %v714
    %v716 = vpop.f32.mrb[0].mxu0
    %717 = vmatprep.mubr.f32.mxu0 %v581
    %718 = vmatmul.mubr.f32.gmra.mrb[0].mxu0 %v580
    %v719 = vpop.f32.mrb[0].mxu0
    %v720 = vadd.f32 0.0, %v719
    %v721 = vpop.f32.mrb[0].mxu0
    %722 = vmatprep.mubr.f32.mxu0 %v583
    %723 = vmatmul.mubr.f32.gmra.mrb[0].mxu0 %v582
    %v724 = vpop.f32.mrb[0].mxu0
    %v725 = vadd.f32 0.0, %v724
    %v726 = vpop.f32.mrb[0].mxu0
    %727 = vmatprep.mubr.f32.mxu0 %v585
    %728 = vmatmul.mubr.f32.gmra.mrb[0].mxu0 %v584
    %v729 = vpop.f32.mrb[0].mxu0
    %v730 = vadd.f32 0.0, %v729
    %v731 = vpop.f32.mrb[0].mxu0
    %732 = vmatprep.mubr.f32.mxu0 %v587
    %733 = vmatmul.mubr.f32.gmra.mrb[0].mxu0 %v586
    %v734 = vpop.f32.mrb[0].mxu0
    %v735 = vadd.f32 0.0, %v734
    %v736 = vpop.f32.mrb[0].mxu0
    %737 = vmatprep.mubr.f32.mxu0 %v589
    %738 = vmatmul.mubr.f32.gmra.mrb[0].mxu0 %v588
    %v739 = vpop.f32.mrb[0].mxu0
    %v740 = vadd.f32 0.0, %v739
    %v741 = vpop.f32.mrb[0].mxu0
    %742 = vmatprep.mubr.f32.mxu0 %v591
    %743 = vmatmul.mubr.f32.gmra.mrb[0].mxu0 %v590
    %v744 = vpop.f32.mrb[0].mxu0
    %v745 = vadd.f32 0.0, %v744
    %v746 = vpop.f32.mrb[0].mxu0
    %747 = vmatprep.mubr.f32.mxu0 %v593
    %748 = vmatmul.mubr.f32.gmra.mrb[0].mxu0 %v592
    %v749 = vpop.f32.mrb[0].mxu0
    %v750 = vadd.f32 0.0, %v749
    %v751 = vpop.f32.mrb[0].mxu0
    %752 = vmatprep.mubr.f32.mxu0 %v595
    %753 = vmatmul.mubr.f32.gmra.mrb[0].mxu0 %v594
    %v754 = vpop.f32.mrb[0].mxu0
    %v755 = vadd.f32 0.0, %v754
    %v756 = vpop.f32.mrb[0].mxu0
    %757 = vmatprep.mubr.f32.mxu0 %v597
    %758 = vmatmul.mubr.f32.gmra.mrb[0].mxu0 %v596
    %v759 = vpop.f32.mrb[0].mxu0
    %v760 = vadd.f32 0.0, %v759
    %v761 = vpop.f32.mrb[0].mxu0
    %762 = vmatprep.mubr.f32.mxu0 %v599
    %763 = vmatmul.mubr.f32.gmra.mrb[0].mxu0 %v598
    %v764 = vpop.f32.mrb[0].mxu0
    %v765 = vadd.f32 0.0, %v764
    %v766 = vpop.f32.mrb[0].mxu0
    %767 = vmatprep.mubr.f32.mxu0 %v601
    %768 = vmatmul.mubr.f32.gmra.mrb[0].mxu0 %v600
    %v769 = vpop.f32.mrb[0].mxu0
    %v770 = vadd.f32 0.0, %v769
    %v771 = vpop.f32.mrb[0].mxu0
    %772 = vmatprep.mubr.f32.mxu0 %v603
    %773 = vmatmul.mubr.f32.gmra.mrb[0].mxu0 %v602
    %v774 = vpop.f32.mrb[0].mxu0
    %v775 = vadd.f32 0.0, %v774
    %v776 = vpop.f32.mrb[0].mxu0
    %777 = vmatprep.mubr.f32.mxu0 %v605
    %778 = vmatmul.mubr.f32.gmra.mrb[0].mxu0 %v604
    %v779 = vpop.f32.mrb[0].mxu0
    %v780 = vadd.f32 0.0, %v779
    %v781 = vpop.f32.mrb[0].mxu0
    %782 = vdwg.mxu0
    %v783 = vsub.f32 %v92, %v108
    %v784 = vsub.f32 %v93, %v109
    %v785 = vsub.f32 %v94, %v110
    %v786 = vsub.f32 %v95, %v111
    %v787 = vsub.f32 %v96, %v112
    %v788 = vsub.f32 %v97, %v113
    %v789 = vsub.f32 %v98, %v114
    %v790 = vsub.f32 %v99, %v115
    %v791 = vsub.f32 %v100, %v116
    %v792 = vsub.f32 %v101, %v117
    %v793 = vsub.f32 %v102, %v118
    %v794 = vsub.f32 %v103, %v119
    %v795 = vsub.f32 %v104, %v120
    %v796 = vsub.f32 %v105, %v121
    %v797 = vsub.f32 %v106, %v122
    %v798 = vsub.f32 %v107, %v123
    %v799 = vld [vmem:[%s5] sm:$0x1]
    %v801 = vlaneseq
    %v802 = vshrl.u32 %v801, 7
    %v803 = vsub.s32 0, %v802
    %v804 = vrot.slane %v799, %v803
    %v806 = vadd.f32 %v783, %v804
    %v807 = vadd.f32 %v784, %v804
    %v808 = vadd.f32 %v785, %v804
    %v809 = vadd.f32 %v786, %v804
    %v810 = vadd.f32 %v787, %v804
    %v811 = vadd.f32 %v788, %v804
    %v812 = vadd.f32 %v789, %v804
    %v813 = vadd.f32 %v790, %v804
    %v814 = vadd.f32 %v791, %v804
    %v815 = vadd.f32 %v792, %v804
    %v816 = vadd.f32 %v793, %v804
    %v817 = vadd.f32 %v794, %v804
    %v818 = vadd.f32 %v795, %v804
    %v819 = vadd.f32 %v796, %v804
    %v820 = vadd.f32 %v797, %v804
    %v821 = vadd.f32 %v798, %v804
    %v822 = vadd.f32 %v806, %v705
    %v823 = vadd.f32 %v807, %v710
    %v824 = vadd.f32 %v808, %v715
    %v825 = vadd.f32 %v809, %v720
    %v826 = vadd.f32 %v810, %v725
    %v827 = vadd.f32 %v811, %v730
    %v828 = vadd.f32 %v812, %v735
    %v829 = vadd.f32 %v813, %v740
    %v830 = vadd.f32 %v814, %v745
    %v831 = vadd.f32 %v815, %v750
    %v832 = vadd.f32 %v816, %v755
    %v833 = vadd.f32 %v817, %v760
    %v834 = vadd.f32 %v818, %v765
    %v835 = vadd.f32 %v819, %v770
    %v836 = vadd.f32 %v820, %v775
    %v837 = vadd.f32 %v821, %v780
    %838 = vst [vmem:[#allocation11] sm:$0xff] %v822
    %839 = vst [vmem:[#allocation11 + $0x8] sm:$0xff] %v823
    %840 = vst [vmem:[#allocation11 + $0x10] sm:$0xff] %v824
    %841 = vst [vmem:[#allocation11 + $0x18] sm:$0xff] %v825
    %842 = vst [vmem:[#allocation11 + $0x20] sm:$0xff] %v826
    %843 = vst [vmem:[#allocation11 + $0x28] sm:$0xff] %v827
    %844 = vst [vmem:[#allocation11 + $0x30] sm:$0xff] %v828
    %845 = vst [vmem:[#allocation11 + $0x38] sm:$0xff] %v829
    %846 = vst [vmem:[#allocation11 + $0x40] sm:$0xff] %v830
    %847 = vst [vmem:[#allocation11 + $0x48] sm:$0xff] %v831
    %848 = vst [vmem:[#allocation11 + $0x50] sm:$0xff] %v832
    %849 = vst [vmem:[#allocation11 + $0x58] sm:$0xff] %v833
    %850 = vst [vmem:[#allocation11 + $0x60] sm:$0xff] %v834
    %851 = vst [vmem:[#allocation11 + $0x68] sm:$0xff] %v835
    %852 = vst [vmem:[#allocation11 + $0x70] sm:$0xff] %v836
    %853 = vst [vmem:[#allocation11 + $0x78] sm:$0xff] %v837
    // Predicated region
    $region46: #{tpu_custom_call.1} parent=1 // pred_check
      _
    $region47: #{tpu_custom_call.1} parent=1 // pred_check_branch
      %855 = sbr.rel (0) target = $region49
    $region48: #{tpu_custom_call.1} parent=1 // pred_region
      %s857 = ssub.s32 2048, 2048
      %858 = vsyncadd [#allocation4], %s857
      %s859 = sshll.u32 [#allocation11], 4
      %s860 = int_to_ptr.vmem [resolvable:$true] %s859
      %865 = dma.vmem_to_hbm [thread:$0]  %s860, 2048, %s6, [#allocation4], 128, 128, 8
    $region49: #{tpu_custom_call.1} parent=1 // pred_fallthru
      _
    // Predicated region
    $region50: #{tpu_custom_call.1} parent=1 // pred_check
      _
    $region51: #{tpu_custom_call.1} parent=1 // pred_check_branch
      %867 = sbr.rel (0) target = $region53
    $region52: #{tpu_custom_call.1} parent=1 // pred_region
      %868 = dma.done [#allocation4], 2048
    $region53: #{tpu_custom_call.1} parent=1 // pred_fallthru
      _
    %869 = vsyncpa [#allocation3], 1
    %870 = vsyncpa [#allocation6], 1
    %871 = vsyncpa [#allocation9], 1
    %872 = vsyncpa [#allocation4], 1

</llo_original>
